<compile_context>
chip_gen: v7x
topology: tpu7x:2x2x1
jax: 0.10.0
libtpu: 0.0.40
codegen_flags: <defaults>
</compile_context>

<pallas_src>
import functools

import jax
import jax.numpy as jnp
from jax.experimental import pallas as pl
from jax.experimental.pallas import tpu as pltpu

INPUT_SIZE = 9
HIDDEN_SIZE = 7
OUTPUT_SIZE = 1

# Per-row HBM traffic is only 9 f32 in + 1 f32 out, so tiles must be large to be
# worth their fixed per-step cost; 32K rows is sized for v7x's smaller VMEM.
MAX_BLOCK_BATCH = 32768


def _round_up(x, m):
    return (x + m - 1) // m * m


def _sigmoid(z):
    # exp -> EUP; approximate reciprocal -> EUP.  VALU stays free for the FMAs.
    return pl.reciprocal(1.0 + jnp.exp(-z), approx=True)


def _dense_vpu(w, b, a):
    """y = w @ a + b with w:(out,in), b:(out,1), a:(in,TB) -> (out,TB).

    Expressed as `in` unrolled broadcasted VPU FMAs instead of a padded MXU
    matmul (K<=9, N<=7 would leave the MXU >94% zero padding).
    """
    out_dim, in_dim = w.shape
    acc = None
    for i in range(in_dim):
        term = w[:, i:i + 1] * a[i:i + 1, :]      # (out,1)*(1,TB) -> (out,TB)
        acc = term if acc is None else acc + term
    return acc + b                                # lane-broadcast bias add


def mlp_kernel(x_ref, w1_ref, b1_ref, w2_ref, b2_ref, w3_ref, b3_ref, o_ref):
    x = x_ref[...]                                            # (IN, TB), batch on lanes
    h1 = _sigmoid(_dense_vpu(w1_ref[...], b1_ref[...], x))    # (H, TB)
    h2 = _sigmoid(_dense_vpu(w2_ref[...], b2_ref[...], h1))   # (H, TB)
    y = _dense_vpu(w3_ref[...], b3_ref[...], h2)              # (1, TB) lane-dense
    o_ref[...] = y.astype(o_ref.dtype)


@functools.partial(jax.jit, static_argnames=("block_batch",))
def neural_net_forward(x, params, *, block_batch=None):
    """Forward pass matching PyTorch: fc3(sigmoid(fc2(sigmoid(fc1(x)))))."""
    w1, b1, w2, b2, w3, b3 = params       # PyTorch layout: w (out,in), b (out,)
    batch = x.shape[0]

    if block_batch is None:
        block_batch = min(_round_up(batch, 128), MAX_BLOCK_BATCH)
    padded = _round_up(batch, block_batch)
    grid = (padded // block_batch,)

    # Lane=batch layout; zero-pad batch up to a whole number of tiles.
    x_t = jnp.pad(x.astype(jnp.float32).T, ((0, 0), (0, padded - batch)))

    b1c = b1.reshape(HIDDEN_SIZE, 1).astype(jnp.float32)
    b2c = b2.reshape(HIDDEN_SIZE, 1).astype(jnp.float32)
    b3c = b3.reshape(OUTPUT_SIZE, 1).astype(jnp.float32)

    def const_spec(shape):
        # Full-array block, constant index_map -> stays VMEM-resident across grid.
        return pl.BlockSpec(shape, lambda i: (0, 0))

    out_t = pl.pallas_call(
        mlp_kernel,
        out_shape=jax.ShapeDtypeStruct((OUTPUT_SIZE, padded), jnp.float32),
        grid=grid,
        in_specs=[
            pl.BlockSpec((INPUT_SIZE, block_batch), lambda i: (0, i)),   # x (pipelined)
            const_spec((HIDDEN_SIZE, INPUT_SIZE)),                       # w1
            const_spec((HIDDEN_SIZE, 1)),                                # b1
            const_spec((HIDDEN_SIZE, HIDDEN_SIZE)),                      # w2
            const_spec((HIDDEN_SIZE, 1)),                                # b2
            const_spec((OUTPUT_SIZE, HIDDEN_SIZE)),                      # w3
            const_spec((OUTPUT_SIZE, 1)),                                # b3
        ],
        out_specs=pl.BlockSpec((OUTPUT_SIZE, block_batch), lambda i: (0, i)),
        compiler_params=pltpu.CompilerParams(
            dimension_semantics=("parallel",)),                          # v7x: 2 TCs
    )(x_t, w1.astype(jnp.float32), b1c,
      w2.astype(jnp.float32), b2c,
      w3.astype(jnp.float32), b3c)

    return out_t[:, :batch].T                                            # (batch, 1)


def init_params(key):
    # nn.Linear layout: weight (out_features, in_features), bias (out_features,).
    k1, k2, k3, k4, k5, k6 = jax.random.split(key, 6)
    w1 = jax.random.normal(k1, (HIDDEN_SIZE, INPUT_SIZE), jnp.float32) * 0.1
    b1 = jax.random.normal(k2, (HIDDEN_SIZE,), jnp.float32) * 0.1
    w2 = jax.random.normal(k3, (HIDDEN_SIZE, HIDDEN_SIZE), jnp.float32) * 0.1
    b2 = jax.random.normal(k4, (HIDDEN_SIZE,), jnp.float32) * 0.1
    w3 = jax.random.normal(k5, (OUTPUT_SIZE, HIDDEN_SIZE), jnp.float32) * 0.1
    b3 = jax.random.normal(k6, (OUTPUT_SIZE,), jnp.float32) * 0.1
    return (w1, b1, w2, b2, w3, b3)


def reference_forward(x, params):
    w1, b1, w2, b2, w3, b3 = params
    h1 = jax.nn.sigmoid(x @ w1.T + b1)
    h2 = jax.nn.sigmoid(h1 @ w2.T + b2)
    return h2 @ w3.T + b3


if __name__ == "__main__":
    key = jax.random.PRNGKey(0)
    kx, kp = jax.random.split(key)

    # Small, deliberately ragged batch (not a multiple of the 128-lane tile) to
    # exercise padding + a multi-step grid; real workloads use the default tile.
    batch = 300
    x = jax.random.normal(kx, (batch, INPUT_SIZE), jnp.float32)
    params = init_params(kp)

    out = neural_net_forward(x, params, block_batch=128)
    out = jax.block_until_ready(out)

    ref = reference_forward(x, params)
    assert out.shape == (batch, OUTPUT_SIZE)
    # Tolerance loosened slightly for the approx-EUP reciprocal in sigmoid.
    assert jnp.allclose(out, ref, atol=1e-2, rtol=1e-2), float(
        jnp.max(jnp.abs(out - ref)))
    print("KERNEL_OK")
</pallas_src>

<mosaic_0001>
module attributes {stable_mosaic.version = 11 : i64} {
  func.func @mlp_kernel(%arg0: i32, %arg1: memref<9x128xf32, #tpu.memory_space<vmem>>, %arg2: memref<7x9xf32, #tpu.memory_space<vmem>>, %arg3: memref<7x1xf32, #tpu.memory_space<vmem>>, %arg4: memref<7x7xf32, #tpu.memory_space<vmem>>, %arg5: memref<7x1xf32, #tpu.memory_space<vmem>>, %arg6: memref<1x7xf32, #tpu.memory_space<vmem>>, %arg7: memref<1x1xf32, #tpu.memory_space<vmem>>, %arg8: memref<1x128xf32, #tpu.memory_space<vmem>>) attributes {dimension_semantics = [#tpu.dimension_semantics<parallel>], iteration_bounds = array<i64: 3>, scalar_prefetch = 0 : i64, scratch_operands = 0 : i64, tpu.core_type = #tpu.core_type<tc>, window_params = [{transform_indices = @transform_0, window_bounds = array<i64: 9, 128>}, {pipeline_mode = #tpu.pipeline_mode<synchronous>, transform_indices = @transform_1, window_bounds = array<i64: 7, 9>}, {pipeline_mode = #tpu.pipeline_mode<synchronous>, transform_indices = @transform_2, window_bounds = array<i64: 7, 1>}, {pipeline_mode = #tpu.pipeline_mode<synchronous>, transform_indices = @transform_3, window_bounds = array<i64: 7, 7>}, {pipeline_mode = #tpu.pipeline_mode<synchronous>, transform_indices = @transform_4, window_bounds = array<i64: 7, 1>}, {pipeline_mode = #tpu.pipeline_mode<synchronous>, transform_indices = @transform_5, window_bounds = array<i64: 1, 7>}, {pipeline_mode = #tpu.pipeline_mode<synchronous>, transform_indices = @transform_6, window_bounds = array<i64: 1, 1>}, {transform_indices = @transform_7, window_bounds = array<i64: 1, 128>}]} {
    %c0 = arith.constant 0 : index
    %c0_0 = arith.constant 0 : index
    %0 = vector.load %arg1[%c0, %c0_0] : memref<9x128xf32, #tpu.memory_space<vmem>>, vector<9x128xf32>
    %c0_1 = arith.constant 0 : index
    %c0_2 = arith.constant 0 : index
    %1 = vector.load %arg2[%c0_1, %c0_2] : memref<7x9xf32, #tpu.memory_space<vmem>>, vector<7x9xf32>
    %c0_3 = arith.constant 0 : index
    %c0_4 = arith.constant 0 : index
    %2 = vector.load %arg3[%c0_3, %c0_4] : memref<7x1xf32, #tpu.memory_space<vmem>>, vector<7x1xf32>
    %3 = vector.extract_strided_slice %1 {offsets = [0, 0], sizes = [7, 1], strides = [1, 1]} : vector<7x9xf32> to vector<7x1xf32>
    %4 = vector.extract_strided_slice %0 {offsets = [0, 0], sizes = [1, 128], strides = [1, 1]} : vector<9x128xf32> to vector<1x128xf32>
    %5 = vector.broadcast %3 : vector<7x1xf32> to vector<7x128xf32>
    %6 = vector.broadcast %4 : vector<1x128xf32> to vector<7x128xf32>
    %7 = arith.mulf %5, %6 : vector<7x128xf32>
    %8 = vector.extract_strided_slice %1 {offsets = [0, 1], sizes = [7, 1], strides = [1, 1]} : vector<7x9xf32> to vector<7x1xf32>
    %9 = vector.extract_strided_slice %0 {offsets = [1, 0], sizes = [1, 128], strides = [1, 1]} : vector<9x128xf32> to vector<1x128xf32>
    %10 = vector.broadcast %8 : vector<7x1xf32> to vector<7x128xf32>
    %11 = vector.broadcast %9 : vector<1x128xf32> to vector<7x128xf32>
    %12 = arith.mulf %10, %11 : vector<7x128xf32>
    %13 = arith.addf %7, %12 : vector<7x128xf32>
    %14 = vector.extract_strided_slice %1 {offsets = [0, 2], sizes = [7, 1], strides = [1, 1]} : vector<7x9xf32> to vector<7x1xf32>
    %15 = vector.extract_strided_slice %0 {offsets = [2, 0], sizes = [1, 128], strides = [1, 1]} : vector<9x128xf32> to vector<1x128xf32>
    %16 = vector.broadcast %14 : vector<7x1xf32> to vector<7x128xf32>
    %17 = vector.broadcast %15 : vector<1x128xf32> to vector<7x128xf32>
    %18 = arith.mulf %16, %17 : vector<7x128xf32>
    %19 = arith.addf %13, %18 : vector<7x128xf32>
    %20 = vector.extract_strided_slice %1 {offsets = [0, 3], sizes = [7, 1], strides = [1, 1]} : vector<7x9xf32> to vector<7x1xf32>
    %21 = vector.extract_strided_slice %0 {offsets = [3, 0], sizes = [1, 128], strides = [1, 1]} : vector<9x128xf32> to vector<1x128xf32>
    %22 = vector.broadcast %20 : vector<7x1xf32> to vector<7x128xf32>
    %23 = vector.broadcast %21 : vector<1x128xf32> to vector<7x128xf32>
    %24 = arith.mulf %22, %23 : vector<7x128xf32>
    %25 = arith.addf %19, %24 : vector<7x128xf32>
    %26 = vector.extract_strided_slice %1 {offsets = [0, 4], sizes = [7, 1], strides = [1, 1]} : vector<7x9xf32> to vector<7x1xf32>
    %27 = vector.extract_strided_slice %0 {offsets = [4, 0], sizes = [1, 128], strides = [1, 1]} : vector<9x128xf32> to vector<1x128xf32>
    %28 = vector.broadcast %26 : vector<7x1xf32> to vector<7x128xf32>
    %29 = vector.broadcast %27 : vector<1x128xf32> to vector<7x128xf32>
    %30 = arith.mulf %28, %29 : vector<7x128xf32>
    %31 = arith.addf %25, %30 : vector<7x128xf32>
    %32 = vector.extract_strided_slice %1 {offsets = [0, 5], sizes = [7, 1], strides = [1, 1]} : vector<7x9xf32> to vector<7x1xf32>
    %33 = vector.extract_strided_slice %0 {offsets = [5, 0], sizes = [1, 128], strides = [1, 1]} : vector<9x128xf32> to vector<1x128xf32>
    %34 = vector.broadcast %32 : vector<7x1xf32> to vector<7x128xf32>
    %35 = vector.broadcast %33 : vector<1x128xf32> to vector<7x128xf32>
    %36 = arith.mulf %34, %35 : vector<7x128xf32>
    %37 = arith.addf %31, %36 : vector<7x128xf32>
    %38 = vector.extract_strided_slice %1 {offsets = [0, 6], sizes = [7, 1], strides = [1, 1]} : vector<7x9xf32> to vector<7x1xf32>
    %39 = vector.extract_strided_slice %0 {offsets = [6, 0], sizes = [1, 128], strides = [1, 1]} : vector<9x128xf32> to vector<1x128xf32>
    %40 = vector.broadcast %38 : vector<7x1xf32> to vector<7x128xf32>
    %41 = vector.broadcast %39 : vector<1x128xf32> to vector<7x128xf32>
    %42 = arith.mulf %40, %41 : vector<7x128xf32>
    %43 = arith.addf %37, %42 : vector<7x128xf32>
    %44 = vector.extract_strided_slice %1 {offsets = [0, 7], sizes = [7, 1], strides = [1, 1]} : vector<7x9xf32> to vector<7x1xf32>
    %45 = vector.extract_strided_slice %0 {offsets = [7, 0], sizes = [1, 128], strides = [1, 1]} : vector<9x128xf32> to vector<1x128xf32>
    %46 = vector.broadcast %44 : vector<7x1xf32> to vector<7x128xf32>
    %47 = vector.broadcast %45 : vector<1x128xf32> to vector<7x128xf32>
    %48 = arith.mulf %46, %47 : vector<7x128xf32>
    %49 = arith.addf %43, %48 : vector<7x128xf32>
    %50 = vector.extract_strided_slice %1 {offsets = [0, 8], sizes = [7, 1], strides = [1, 1]} : vector<7x9xf32> to vector<7x1xf32>
    %51 = vector.extract_strided_slice %0 {offsets = [8, 0], sizes = [1, 128], strides = [1, 1]} : vector<9x128xf32> to vector<1x128xf32>
    %52 = vector.broadcast %50 : vector<7x1xf32> to vector<7x128xf32>
    %53 = vector.broadcast %51 : vector<1x128xf32> to vector<7x128xf32>
    %54 = arith.mulf %52, %53 : vector<7x128xf32>
    %55 = arith.addf %49, %54 : vector<7x128xf32>
    %56 = vector.broadcast %2 : vector<7x1xf32> to vector<7x128xf32>
    %57 = arith.addf %55, %56 : vector<7x128xf32>
    %cst = arith.constant 0.000000e+00 : f32
    %58 = vector.broadcast %cst : f32 to vector<7x128xf32>
    %59 = arith.subf %58, %57 : vector<7x128xf32>
    %60 = math.exp %59 : vector<7x128xf32>
    %cst_5 = arith.constant 1.000000e+00 : f32
    %61 = vector.broadcast %cst_5 : f32 to vector<7x128xf32>
    %62 = arith.addf %61, %60 : vector<7x128xf32>
    %63 = tpu.reciprocal %62 {approx = true} : vector<7x128xf32> -> vector<7x128xf32>
    %c0_6 = arith.constant 0 : index
    %c0_7 = arith.constant 0 : index
    %64 = vector.load %arg4[%c0_6, %c0_7] : memref<7x7xf32, #tpu.memory_space<vmem>>, vector<7x7xf32>
    %c0_8 = arith.constant 0 : index
    %c0_9 = arith.constant 0 : index
    %65 = vector.load %arg5[%c0_8, %c0_9] : memref<7x1xf32, #tpu.memory_space<vmem>>, vector<7x1xf32>
    %66 = vector.extract_strided_slice %64 {offsets = [0, 0], sizes = [7, 1], strides = [1, 1]} : vector<7x7xf32> to vector<7x1xf32>
    %67 = vector.extract_strided_slice %63 {offsets = [0, 0], sizes = [1, 128], strides = [1, 1]} : vector<7x128xf32> to vector<1x128xf32>
    %68 = vector.broadcast %66 : vector<7x1xf32> to vector<7x128xf32>
    %69 = vector.broadcast %67 : vector<1x128xf32> to vector<7x128xf32>
    %70 = arith.mulf %68, %69 : vector<7x128xf32>
    %71 = vector.extract_strided_slice %64 {offsets = [0, 1], sizes = [7, 1], strides = [1, 1]} : vector<7x7xf32> to vector<7x1xf32>
    %72 = vector.extract_strided_slice %63 {offsets = [1, 0], sizes = [1, 128], strides = [1, 1]} : vector<7x128xf32> to vector<1x128xf32>
    %73 = vector.broadcast %71 : vector<7x1xf32> to vector<7x128xf32>
    %74 = vector.broadcast %72 : vector<1x128xf32> to vector<7x128xf32>
    %75 = arith.mulf %73, %74 : vector<7x128xf32>
    %76 = arith.addf %70, %75 : vector<7x128xf32>
    %77 = vector.extract_strided_slice %64 {offsets = [0, 2], sizes = [7, 1], strides = [1, 1]} : vector<7x7xf32> to vector<7x1xf32>
    %78 = vector.extract_strided_slice %63 {offsets = [2, 0], sizes = [1, 128], strides = [1, 1]} : vector<7x128xf32> to vector<1x128xf32>
    %79 = vector.broadcast %77 : vector<7x1xf32> to vector<7x128xf32>
    %80 = vector.broadcast %78 : vector<1x128xf32> to vector<7x128xf32>
    %81 = arith.mulf %79, %80 : vector<7x128xf32>
    %82 = arith.addf %76, %81 : vector<7x128xf32>
    %83 = vector.extract_strided_slice %64 {offsets = [0, 3], sizes = [7, 1], strides = [1, 1]} : vector<7x7xf32> to vector<7x1xf32>
    %84 = vector.extract_strided_slice %63 {offsets = [3, 0], sizes = [1, 128], strides = [1, 1]} : vector<7x128xf32> to vector<1x128xf32>
    %85 = vector.broadcast %83 : vector<7x1xf32> to vector<7x128xf32>
    %86 = vector.broadcast %84 : vector<1x128xf32> to vector<7x128xf32>
    %87 = arith.mulf %85, %86 : vector<7x128xf32>
    %88 = arith.addf %82, %87 : vector<7x128xf32>
    %89 = vector.extract_strided_slice %64 {offsets = [0, 4], sizes = [7, 1], strides = [1, 1]} : vector<7x7xf32> to vector<7x1xf32>
    %90 = vector.extract_strided_slice %63 {offsets = [4, 0], sizes = [1, 128], strides = [1, 1]} : vector<7x128xf32> to vector<1x128xf32>
    %91 = vector.broadcast %89 : vector<7x1xf32> to vector<7x128xf32>
    %92 = vector.broadcast %90 : vector<1x128xf32> to vector<7x128xf32>
    %93 = arith.mulf %91, %92 : vector<7x128xf32>
    %94 = arith.addf %88, %93 : vector<7x128xf32>
    %95 = vector.extract_strided_slice %64 {offsets = [0, 5], sizes = [7, 1], strides = [1, 1]} : vector<7x7xf32> to vector<7x1xf32>
    %96 = vector.extract_strided_slice %63 {offsets = [5, 0], sizes = [1, 128], strides = [1, 1]} : vector<7x128xf32> to vector<1x128xf32>
    %97 = vector.broadcast %95 : vector<7x1xf32> to vector<7x128xf32>
    %98 = vector.broadcast %96 : vector<1x128xf32> to vector<7x128xf32>
    %99 = arith.mulf %97, %98 : vector<7x128xf32>
    %100 = arith.addf %94, %99 : vector<7x128xf32>
    %101 = vector.extract_strided_slice %64 {offsets = [0, 6], sizes = [7, 1], strides = [1, 1]} : vector<7x7xf32> to vector<7x1xf32>
    %102 = vector.extract_strided_slice %63 {offsets = [6, 0], sizes = [1, 128], strides = [1, 1]} : vector<7x128xf32> to vector<1x128xf32>
    %103 = vector.broadcast %101 : vector<7x1xf32> to vector<7x128xf32>
    %104 = vector.broadcast %102 : vector<1x128xf32> to vector<7x128xf32>
    %105 = arith.mulf %103, %104 : vector<7x128xf32>
    %106 = arith.addf %100, %105 : vector<7x128xf32>
    %107 = vector.broadcast %65 : vector<7x1xf32> to vector<7x128xf32>
    %108 = arith.addf %106, %107 : vector<7x128xf32>
    %cst_10 = arith.constant 0.000000e+00 : f32
    %109 = vector.broadcast %cst_10 : f32 to vector<7x128xf32>
    %110 = arith.subf %109, %108 : vector<7x128xf32>
    %111 = math.exp %110 : vector<7x128xf32>
    %cst_11 = arith.constant 1.000000e+00 : f32
    %112 = vector.broadcast %cst_11 : f32 to vector<7x128xf32>
    %113 = arith.addf %112, %111 : vector<7x128xf32>
    %114 = tpu.reciprocal %113 {approx = true} : vector<7x128xf32> -> vector<7x128xf32>
    %c0_12 = arith.constant 0 : index
    %c0_13 = arith.constant 0 : index
    %115 = vector.load %arg6[%c0_12, %c0_13] : memref<1x7xf32, #tpu.memory_space<vmem>>, vector<1x7xf32>
    %c0_14 = arith.constant 0 : index
    %c0_15 = arith.constant 0 : index
    %116 = vector.load %arg7[%c0_14, %c0_15] : memref<1x1xf32, #tpu.memory_space<vmem>>, vector<1x1xf32>
    %117 = vector.extract_strided_slice %115 {offsets = [0, 0], sizes = [1, 1], strides = [1, 1]} : vector<1x7xf32> to vector<1x1xf32>
    %118 = vector.extract_strided_slice %114 {offsets = [0, 0], sizes = [1, 128], strides = [1, 1]} : vector<7x128xf32> to vector<1x128xf32>
    %119 = vector.broadcast %117 : vector<1x1xf32> to vector<1x128xf32>
    %120 = arith.mulf %119, %118 : vector<1x128xf32>
    %121 = vector.extract_strided_slice %115 {offsets = [0, 1], sizes = [1, 1], strides = [1, 1]} : vector<1x7xf32> to vector<1x1xf32>
    %122 = vector.extract_strided_slice %114 {offsets = [1, 0], sizes = [1, 128], strides = [1, 1]} : vector<7x128xf32> to vector<1x128xf32>
    %123 = vector.broadcast %121 : vector<1x1xf32> to vector<1x128xf32>
    %124 = arith.mulf %123, %122 : vector<1x128xf32>
    %125 = arith.addf %120, %124 : vector<1x128xf32>
    %126 = vector.extract_strided_slice %115 {offsets = [0, 2], sizes = [1, 1], strides = [1, 1]} : vector<1x7xf32> to vector<1x1xf32>
    %127 = vector.extract_strided_slice %114 {offsets = [2, 0], sizes = [1, 128], strides = [1, 1]} : vector<7x128xf32> to vector<1x128xf32>
    %128 = vector.broadcast %126 : vector<1x1xf32> to vector<1x128xf32>
    %129 = arith.mulf %128, %127 : vector<1x128xf32>
    %130 = arith.addf %125, %129 : vector<1x128xf32>
    %131 = vector.extract_strided_slice %115 {offsets = [0, 3], sizes = [1, 1], strides = [1, 1]} : vector<1x7xf32> to vector<1x1xf32>
    %132 = vector.extract_strided_slice %114 {offsets = [3, 0], sizes = [1, 128], strides = [1, 1]} : vector<7x128xf32> to vector<1x128xf32>
    %133 = vector.broadcast %131 : vector<1x1xf32> to vector<1x128xf32>
    %134 = arith.mulf %133, %132 : vector<1x128xf32>
    %135 = arith.addf %130, %134 : vector<1x128xf32>
    %136 = vector.extract_strided_slice %115 {offsets = [0, 4], sizes = [1, 1], strides = [1, 1]} : vector<1x7xf32> to vector<1x1xf32>
    %137 = vector.extract_strided_slice %114 {offsets = [4, 0], sizes = [1, 128], strides = [1, 1]} : vector<7x128xf32> to vector<1x128xf32>
    %138 = vector.broadcast %136 : vector<1x1xf32> to vector<1x128xf32>
    %139 = arith.mulf %138, %137 : vector<1x128xf32>
    %140 = arith.addf %135, %139 : vector<1x128xf32>
    %141 = vector.extract_strided_slice %115 {offsets = [0, 5], sizes = [1, 1], strides = [1, 1]} : vector<1x7xf32> to vector<1x1xf32>
    %142 = vector.extract_strided_slice %114 {offsets = [5, 0], sizes = [1, 128], strides = [1, 1]} : vector<7x128xf32> to vector<1x128xf32>
    %143 = vector.broadcast %141 : vector<1x1xf32> to vector<1x128xf32>
    %144 = arith.mulf %143, %142 : vector<1x128xf32>
    %145 = arith.addf %140, %144 : vector<1x128xf32>
    %146 = vector.extract_strided_slice %115 {offsets = [0, 6], sizes = [1, 1], strides = [1, 1]} : vector<1x7xf32> to vector<1x1xf32>
    %147 = vector.extract_strided_slice %114 {offsets = [6, 0], sizes = [1, 128], strides = [1, 1]} : vector<7x128xf32> to vector<1x128xf32>
    %148 = vector.broadcast %146 : vector<1x1xf32> to vector<1x128xf32>
    %149 = arith.mulf %148, %147 : vector<1x128xf32>
    %150 = arith.addf %145, %149 : vector<1x128xf32>
    %151 = vector.broadcast %116 : vector<1x1xf32> to vector<1x128xf32>
    %152 = arith.addf %150, %151 : vector<1x128xf32>
    %c0_16 = arith.constant 0 : index
    %c0_17 = arith.constant 0 : index
    %153 = vector.load %arg8[%c0_16, %c0_17] : memref<1x128xf32, #tpu.memory_space<vmem>>, vector<1x128xf32>
    tpu.vector_store %arg8[%c0_16, %c0_17], %152 {strides = array<i32>} : memref<1x128xf32, #tpu.memory_space<vmem>>, vector<1x128xf32>,
    return
  }
  func.func @transform_0(%arg0: i32) -> (i32, i32) {
    %c0_i32 = arith.constant 0 : i32
    %c0_i32_0 = arith.constant 0 : i32
    return %c0_i32, %arg0 : i32, i32
  }
  func.func @transform_1(%arg0: i32) -> (i32, i32) {
    %c0_i32 = arith.constant 0 : i32
    %c0_i32_0 = arith.constant 0 : i32
    %c0_i32_1 = arith.constant 0 : i32
    return %c0_i32, %c0_i32_0 : i32, i32
  }
  func.func @transform_2(%arg0: i32) -> (i32, i32) {
    %c0_i32 = arith.constant 0 : i32
    %c0_i32_0 = arith.constant 0 : i32
    %c0_i32_1 = arith.constant 0 : i32
    return %c0_i32, %c0_i32_0 : i32, i32
  }
  func.func @transform_3(%arg0: i32) -> (i32, i32) {
    %c0_i32 = arith.constant 0 : i32
    %c0_i32_0 = arith.constant 0 : i32
    %c0_i32_1 = arith.constant 0 : i32
    return %c0_i32, %c0_i32_0 : i32, i32
  }
  func.func @transform_4(%arg0: i32) -> (i32, i32) {
    %c0_i32 = arith.constant 0 : i32
    %c0_i32_0 = arith.constant 0 : i32
    %c0_i32_1 = arith.constant 0 : i32
    return %c0_i32, %c0_i32_0 : i32, i32
  }
  func.func @transform_5(%arg0: i32) -> (i32, i32) {
    %c0_i32 = arith.constant 0 : i32
    %c0_i32_0 = arith.constant 0 : i32
    %c0_i32_1 = arith.constant 0 : i32
    return %c0_i32, %c0_i32_0 : i32, i32
  }
  func.func @transform_6(%arg0: i32) -> (i32, i32) {
    %c0_i32 = arith.constant 0 : i32
    %c0_i32_0 = arith.constant 0 : i32
    %c0_i32_1 = arith.constant 0 : i32
    return %c0_i32, %c0_i32_0 : i32, i32
  }
  func.func @transform_7(%arg0: i32) -> (i32, i32) {
    %c0_i32 = arith.constant 0 : i32
    %c0_i32_0 = arith.constant 0 : i32
    return %c0_i32, %arg0 : i32, i32
  }
}

</mosaic_0001>

<llo_original>
// kernel: neural_net_forward.1
$region0: #{neural_net_forward.1}
  #allocation0 [shape = 'u32[]', space=smem, size = 0x4, offset = 0x4, fixed_abs, tag = 'smem constant byte address 0x4 - core index']
  #allocation1 [shape = 'u32[144,128]{1,0:T(1,128)}', space=vmem, size = 0x12000, scoped, tag = 'internal scratch']
  #allocation2 [shape = 'f32[1,1]{1,0:T(1,128)S(1)}', space=vmem, size = 0x200, scoped, tag = 'scoped memory for neural_net_forward.1']
  %s0 = inlined_call_operand.vmem [shape: f32[9,384], index: 0, kind: input, shape index: {}]
  %s1 = inlined_call_operand.vmem [shape: f32[7,9], index: 1, kind: input, shape index: {}]
  %s2 = inlined_call_operand.vmem [shape: f32[7,1], index: 2, kind: input, shape index: {}]
  %s3 = inlined_call_operand.vmem [shape: f32[7,7], index: 3, kind: input, shape index: {}]
  %s4 = inlined_call_operand.vmem [shape: f32[7,1], index: 4, kind: input, shape index: {}]
  %s5 = inlined_call_operand.vmem [shape: f32[1,7], index: 5, kind: input, shape index: {}]
  %s6 = inlined_call_operand.<no memory space> [shape: f32[1,1], index: 6, kind: input, shape index: {}]
  %s7 = inlined_call_operand.vmem [shape: f32[1,384], index: 7, kind: output, shape index: {}]
  %s8 = sld [smem:[#allocation0]]
  $region99: #{neural_net_forward.1} parent=0
    _
  %s10 = ssub.s32 1, %s8
  %s11 = scalar_select 0, %s10, %s8
  %v12 = vstv %s6
  %13 = vst [vmem:[#allocation2] sm:$0x1] %v12
  $region1: #{neural_net_forward.1} parent=0
    #allocation3 [shape = 'u8[16384]{0}', space=vmem, size = 0x4000, scoped, tag = 'input window, operand 0']
    loop: start=0, step=1, limit=5
    $region2: #{neural_net_forward.1} parent=1 // loop_pre_header
      _
    $region3: #{neural_net_forward.1} parent=1 // loop_header
      %s15 = sphi 0, %s19
      %p16 = scmp.ge.s32.totalorder %s15, 5
      %s25 = sphi 0, %s27
      %s28 = sphi 0, %s25
      %s29 = sphi 0, %s28
      %s45 = sphi 0, %s29
      %s49 = sphi 0, %s49
      %s51 = sphi 0, %s49
      %s52 = sphi 0, %s51
      %s66 = sphi 0, %s52
      %s70 = sphi 0, %s70
      %s72 = sphi 0, %s70
      %s73 = sphi 0, %s72
      %s87 = sphi 0, %s73
      %s91 = sphi 0, %s91
      %s93 = sphi 0, %s91
      %s94 = sphi 0, %s93
      %s108 = sphi 0, %s94
      %s112 = sphi 0, %s112
      %s114 = sphi 0, %s112
      %s115 = sphi 0, %s114
      %s129 = sphi 0, %s115
      %s133 = sphi 0, %s133
      %s135 = sphi 0, %s133
      %s136 = sphi 0, %s135
      %s150 = sphi 0, %s136
      %s154 = sphi 0, %s154
      %s156 = sphi 0, %s154
      %s157 = sphi 0, %s156
      %s171 = sphi 0, %s157
      %s177 = sphi 0, %s179
      %s180 = sphi 0, %s177
      %s181 = sphi 0, %s180
      %s197 = sphi 0, %s181
    $region4: #{neural_net_forward.1} parent=1 // loop_header_branch
      %18 = sbr.rel (%p16) target = $region8
    $region5: #{neural_net_forward.1} parent=1 // loop_body
      %s20 = ssub.s32 %s15, 1
      %s21 = ssub.s32 %s15, 2
      %s22 = sadd.s32 %s15, 1
      %s23 = ssub.s32 %s15, %s22
      %p24 = scmp.eq.s32.totalorder %s23, 0
      %s26 = sadd.s32 %s25, 1
      %s27 = scalar_select %p24, %s25, %s26
      %p30 = pneg %p24
      %p31 = scmp.eq.s32.totalorder %s15, 2
      %p32 = por %p30, %p31
      %p33 = scmp.ne.s32.totalorder %s25, %s28
      %p34 = scmp.eq.s32.totalorder %s15, 0
      %p35 = por %p33, %p34
      %p36 = scmp.ne.s32.totalorder %s25, %s28
      %p37 = scmp.eq.s32.totalorder %s20, 2
      %p38 = por %p36, %p37
      %p39 = scmp.ne.s32.totalorder %s28, %s29
      %p40 = scmp.eq.s32.totalorder %s20, 0
      %p41 = por %p39, %p40
      %p42 = scmp.ne.s32.totalorder %s28, %s29
      %p43 = scmp.eq.s32.totalorder %s21, 2
      %p44 = por %p42, %p43
      %p46 = scmp.ne.s32.totalorder %s29, %s45
      %p47 = scmp.eq.s32.totalorder %s21, 0
      %p48 = por %p46, %p47
      %s50 = sadd.s32 %s49, 1
      %p53 = scmp.eq.s32.totalorder %s15, 2
      %p54 = scmp.ne.s32.totalorder %s49, %s51
      %p55 = scmp.eq.s32.totalorder %s15, 0
      %p56 = por %p54, %p55
      %p57 = scmp.ne.s32.totalorder %s49, %s51
      %p58 = scmp.eq.s32.totalorder %s20, 2
      %p59 = por %p57, %p58
      %p60 = scmp.ne.s32.totalorder %s51, %s52
      %p61 = scmp.eq.s32.totalorder %s20, 0
      %p62 = por %p60, %p61
      %p63 = scmp.ne.s32.totalorder %s51, %s52
      %p64 = scmp.eq.s32.totalorder %s21, 2
      %p65 = por %p63, %p64
      %p67 = scmp.ne.s32.totalorder %s52, %s66
      %p68 = scmp.eq.s32.totalorder %s21, 0
      %p69 = por %p67, %p68
      %s71 = sadd.s32 %s70, 1
      %p74 = scmp.eq.s32.totalorder %s15, 2
      %p75 = scmp.ne.s32.totalorder %s70, %s72
      %p76 = scmp.eq.s32.totalorder %s15, 0
      %p77 = por %p75, %p76
      %p78 = scmp.ne.s32.totalorder %s70, %s72
      %p79 = scmp.eq.s32.totalorder %s20, 2
      %p80 = por %p78, %p79
      %p81 = scmp.ne.s32.totalorder %s72, %s73
      %p82 = scmp.eq.s32.totalorder %s20, 0
      %p83 = por %p81, %p82
      %p84 = scmp.ne.s32.totalorder %s72, %s73
      %p85 = scmp.eq.s32.totalorder %s21, 2
      %p86 = por %p84, %p85
      %p88 = scmp.ne.s32.totalorder %s73, %s87
      %p89 = scmp.eq.s32.totalorder %s21, 0
      %p90 = por %p88, %p89
      %s92 = sadd.s32 %s91, 1
      %p95 = scmp.eq.s32.totalorder %s15, 2
      %p96 = scmp.ne.s32.totalorder %s91, %s93
      %p97 = scmp.eq.s32.totalorder %s15, 0
      %p98 = por %p96, %p97
      %p99 = scmp.ne.s32.totalorder %s91, %s93
      %p100 = scmp.eq.s32.totalorder %s20, 2
      %p101 = por %p99, %p100
      %p102 = scmp.ne.s32.totalorder %s93, %s94
      %p103 = scmp.eq.s32.totalorder %s20, 0
      %p104 = por %p102, %p103
      %p105 = scmp.ne.s32.totalorder %s93, %s94
      %p106 = scmp.eq.s32.totalorder %s21, 2
      %p107 = por %p105, %p106
      %p109 = scmp.ne.s32.totalorder %s94, %s108
      %p110 = scmp.eq.s32.totalorder %s21, 0
      %p111 = por %p109, %p110
      %s113 = sadd.s32 %s112, 1
      %p116 = scmp.eq.s32.totalorder %s15, 2
      %p117 = scmp.ne.s32.totalorder %s112, %s114
      %p118 = scmp.eq.s32.totalorder %s15, 0
      %p119 = por %p117, %p118
      %p120 = scmp.ne.s32.totalorder %s112, %s114
      %p121 = scmp.eq.s32.totalorder %s20, 2
      %p122 = por %p120, %p121
      %p123 = scmp.ne.s32.totalorder %s114, %s115
      %p124 = scmp.eq.s32.totalorder %s20, 0
      %p125 = por %p123, %p124
      %p126 = scmp.ne.s32.totalorder %s114, %s115
      %p127 = scmp.eq.s32.totalorder %s21, 2
      %p128 = por %p126, %p127
      %p130 = scmp.ne.s32.totalorder %s115, %s129
      %p131 = scmp.eq.s32.totalorder %s21, 0
      %p132 = por %p130, %p131
      %s134 = sadd.s32 %s133, 1
      %p137 = scmp.eq.s32.totalorder %s15, 2
      %p138 = scmp.ne.s32.totalorder %s133, %s135
      %p139 = scmp.eq.s32.totalorder %s15, 0
      %p140 = por %p138, %p139
      %p141 = scmp.ne.s32.totalorder %s133, %s135
      %p142 = scmp.eq.s32.totalorder %s20, 2
      %p143 = por %p141, %p142
      %p144 = scmp.ne.s32.totalorder %s135, %s136
      %p145 = scmp.eq.s32.totalorder %s20, 0
      %p146 = por %p144, %p145
      %p147 = scmp.ne.s32.totalorder %s135, %s136
      %p148 = scmp.eq.s32.totalorder %s21, 2
      %p149 = por %p147, %p148
      %p151 = scmp.ne.s32.totalorder %s136, %s150
      %p152 = scmp.eq.s32.totalorder %s21, 0
      %p153 = por %p151, %p152
      %s155 = sadd.s32 %s154, 1
      %p158 = scmp.eq.s32.totalorder %s15, 2
      %p159 = scmp.ne.s32.totalorder %s154, %s156
      %p160 = scmp.eq.s32.totalorder %s15, 0
      %p161 = por %p159, %p160
      %p162 = scmp.ne.s32.totalorder %s154, %s156
      %p163 = scmp.eq.s32.totalorder %s20, 2
      %p164 = por %p162, %p163
      %p165 = scmp.ne.s32.totalorder %s156, %s157
      %p166 = scmp.eq.s32.totalorder %s20, 0
      %p167 = por %p165, %p166
      %p168 = scmp.ne.s32.totalorder %s156, %s157
      %p169 = scmp.eq.s32.totalorder %s21, 2
      %p170 = por %p168, %p169
      %p172 = scmp.ne.s32.totalorder %s157, %s171
      %p173 = scmp.eq.s32.totalorder %s21, 0
      %p174 = por %p172, %p173
      %s175 = ssub.s32 %s15, %s22
      %p176 = scmp.eq.s32.totalorder %s175, 0
      %s178 = sadd.s32 %s177, 1
      %s179 = scalar_select %p176, %s177, %s178
      %p182 = pneg %p176
      %p183 = scmp.eq.s32.totalorder %s15, 2
      %p184 = por %p182, %p183
      %p185 = scmp.ne.s32.totalorder %s177, %s180
      %p186 = scmp.eq.s32.totalorder %s15, 0
      %p187 = por %p185, %p186
      %p188 = scmp.ne.s32.totalorder %s177, %s180
      %p189 = scmp.eq.s32.totalorder %s20, 2
      %p190 = por %p188, %p189
      %p191 = scmp.ne.s32.totalorder %s180, %s181
      %p192 = scmp.eq.s32.totalorder %s20, 0
      %p193 = por %p191, %p192
      %p194 = scmp.ne.s32.totalorder %s180, %s181
      %p195 = scmp.eq.s32.totalorder %s21, 2
      %p196 = por %p194, %p195
      %p198 = scmp.ne.s32.totalorder %s181, %s197
      %p199 = scmp.eq.s32.totalorder %s21, 0
      %p200 = por %p198, %p199
      %p201 = scmp.le.s32.totalorder 1, %s15
      %p202 = scmp.lt.s32.totalorder %s15, 4
      %p203 = pnand %p201, %p202
      %p204 = pneg %p203
      // Predicated region
      $region9: #{neural_net_forward.1} parent=5 // pred_check
        _
      $region10: #{neural_net_forward.1} parent=5 // pred_check_branch
        %206 = sbr.rel (%p203) target = $region12
      $region11: #{neural_net_forward.1} parent=5 // pred_region
        %s207 = ssub.s32 %s15, 1
        // Predicated region
        $region13: #{neural_net_forward.1} parent=11 // pred_check
          %p208 = pneg %p62
        $region14: #{neural_net_forward.1} parent=11 // pred_check_branch
          %210 = sbr.rel (%p208) target = $region16
        $region15: #{neural_net_forward.1} parent=11 // pred_region
          _
        $region16: #{neural_net_forward.1} parent=11 // pred_fallthru
          _
        // Predicated region
        $region17: #{neural_net_forward.1} parent=11 // pred_check
          %p211 = pneg %p83
        $region18: #{neural_net_forward.1} parent=11 // pred_check_branch
          %213 = sbr.rel (%p211) target = $region20
        $region19: #{neural_net_forward.1} parent=11 // pred_region
          _
        $region20: #{neural_net_forward.1} parent=11 // pred_fallthru
          _
        // Predicated region
        $region21: #{neural_net_forward.1} parent=11 // pred_check
          %p214 = pneg %p104
        $region22: #{neural_net_forward.1} parent=11 // pred_check_branch
          %216 = sbr.rel (%p214) target = $region24
        $region23: #{neural_net_forward.1} parent=11 // pred_region
          _
        $region24: #{neural_net_forward.1} parent=11 // pred_fallthru
          _
        // Predicated region
        $region25: #{neural_net_forward.1} parent=11 // pred_check
          %p217 = pneg %p125
        $region26: #{neural_net_forward.1} parent=11 // pred_check_branch
          %219 = sbr.rel (%p217) target = $region28
        $region27: #{neural_net_forward.1} parent=11 // pred_region
          _
        $region28: #{neural_net_forward.1} parent=11 // pred_fallthru
          _
        // Predicated region
        $region29: #{neural_net_forward.1} parent=11 // pred_check
          %p220 = pneg %p146
        $region30: #{neural_net_forward.1} parent=11 // pred_check_branch
          %222 = sbr.rel (%p220) target = $region32
        $region31: #{neural_net_forward.1} parent=11 // pred_region
          _
        $region32: #{neural_net_forward.1} parent=11 // pred_fallthru
          _
        // Predicated region
        $region33: #{neural_net_forward.1} parent=11 // pred_check
          %p223 = pneg %p167
        $region34: #{neural_net_forward.1} parent=11 // pred_check_branch
          %225 = sbr.rel (%p223) target = $region36
        $region35: #{neural_net_forward.1} parent=11 // pred_region
          _
        $region36: #{neural_net_forward.1} parent=11 // pred_fallthru
          _
      $region12: #{neural_net_forward.1} parent=5 // pred_fallthru
        _
      %p226 = scmp.lt.s32.totalorder %s15, 3
      // Predicated region
      $region37: #{neural_net_forward.1} parent=5 // pred_check
        %p227 = pneg %p226
      $region38: #{neural_net_forward.1} parent=5 // pred_check_branch
        %229 = sbr.rel (%p227) target = $region40
      $region39: #{neural_net_forward.1} parent=5 // pred_region
        // Predicated region
        $region41: #{neural_net_forward.1} parent=39 // pred_check
          %p230 = pneg %p35
        $region42: #{neural_net_forward.1} parent=39 // pred_check_branch
          %232 = sbr.rel (%p230) target = $region44
        $region43: #{neural_net_forward.1} parent=39 // pred_region
          %s233 = sand.u32 %s25, 1
          %s234 = sand.u32 %s25, 1
          %s235 = smul.addr %s234, 16
          %s236 = scalar_lea.vmem [#allocation3], %s235
          %s237 = smul.addr %s15, 8
          %s238 = scalar_lea.vmem %s0, %s237
          // Predicated region
          $region45: #{neural_net_forward.1} parent=43 // pred_check
            _
          $region46: #{neural_net_forward.1} parent=43 // pred_check_branch
            %240 = sbr.rel (0) target = $region48
          $region47: #{neural_net_forward.1} parent=43 // pred_region
            // Predicated region
            $region49: #{neural_net_forward.1} parent=47 // pred_check
              _
            $region50: #{neural_net_forward.1} parent=47 // pred_check_branch
              %242 = sbr.rel (0) target = $region52
            $region51: #{neural_net_forward.1} parent=47 // pred_region
              // Predicated region
              $region64: #{neural_net_forward.1} parent=51 // pred_check
                _
              $region65: #{neural_net_forward.1} parent=51 // pred_check_branch
                %259 = sbr.rel (0) target = $region67
              $region66: #{neural_net_forward.1} parent=51 // pred_region
                loop: start=0, step=1, limit=1
                $region68: #{neural_net_forward.1} parent=66 // loop_pre_header
                  _
                $region69: #{neural_net_forward.1} parent=66 // loop_header
                  %s261 = sphi 0, %s265
                  %p262 = scmp.ge.s32.totalorder %s261, 1
                  %s266 = sphi %s238, %s238
                  %s267 = sphi %s236, %s236
                $region70: #{neural_net_forward.1} parent=66 // loop_header_branch
                  %264 = sbr.rel (%p262) target = $region74
                $region71: #{neural_net_forward.1} parent=66 // loop_body
                  %v268 = vld [vmem:[%s266] sm:$0xff]
                  %269 = vst [vmem:[%s267] sm:$0xff] %v268
                  %v270 = vld [vmem:[%s266 + $0x18] sm:$0xff]
                  %271 = vst [vmem:[%s267 + $0x8] sm:$0xff] %v270
                $region72: #{neural_net_forward.1} parent=66 // loop_footer
                  %s265 = sadd.s32 1, %s261
                $region73: #{neural_net_forward.1} parent=66 // loop_footer_branch
                  %260 = sbr.rel target = $region69
                $region74: #{neural_net_forward.1} parent=66 // loop_exit
                  _
              $region67: #{neural_net_forward.1} parent=51 // pred_fallthru
                _
              // Predicated region
              $region75: #{neural_net_forward.1} parent=51 // pred_check
                _
              $region76: #{neural_net_forward.1} parent=51 // pred_check_branch
                %273 = sbr.rel target = $region78
              $region77: #{neural_net_forward.1} parent=51 // pred_region
                _
              $region78: #{neural_net_forward.1} parent=51 // pred_fallthru
                _
            $region52: #{neural_net_forward.1} parent=47 // pred_fallthru
              _
            // Predicated region
            $region53: #{neural_net_forward.1} parent=47 // pred_check
              _
            $region54: #{neural_net_forward.1} parent=47 // pred_check_branch
              %244 = sbr.rel target = $region56
            $region55: #{neural_net_forward.1} parent=47 // pred_region
              loop: start=0, step=1, limit=1
              $region57: #{neural_net_forward.1} parent=55 // loop_pre_header
                _
              $region58: #{neural_net_forward.1} parent=55 // loop_header
                %s247 = sphi 0, %s251
                %p248 = scmp.ge.s32.totalorder %s247, 1
                %s252 = sphi %s238, %s238
                %s253 = sphi %s236, %s236
              $region59: #{neural_net_forward.1} parent=55 // loop_header_branch
                %250 = sbr.rel (%p248) target = $region63
              $region60: #{neural_net_forward.1} parent=55 // loop_body
                %v254 = vld [vmem:[%s252] sm:$0xff]
                %255 = vst [vmem:[%s253] sm:$0xff] %v254
                %v256 = vld [vmem:[%s252 + $0x18] sm:$0xff]
                %257 = vst [vmem:[%s253 + $0x8] sm:$0xff] %v256
              $region61: #{neural_net_forward.1} parent=55 // loop_footer
                %s251 = sadd.s32 1, %s247
              $region62: #{neural_net_forward.1} parent=55 // loop_footer_branch
                %246 = sbr.rel target = $region58
              $region63: #{neural_net_forward.1} parent=55 // loop_exit
                _
            $region56: #{neural_net_forward.1} parent=47 // pred_fallthru
              _
          $region48: #{neural_net_forward.1} parent=43 // pred_fallthru
            _
          %274 = vnop
        $region44: #{neural_net_forward.1} parent=39 // pred_fallthru
          _
      $region40: #{neural_net_forward.1} parent=5 // pred_fallthru
        _
      %p275 = scmp.le.s32.totalorder 1, %s15
      %p276 = scmp.lt.s32.totalorder %s15, 4
      %p277 = pnand %p275, %p276
      %p278 = pneg %p277
      // Predicated region
      $region79: #{neural_net_forward.1} parent=5 // pred_check
        _
      $region80: #{neural_net_forward.1} parent=5 // pred_check_branch
        %280 = sbr.rel (%p277) target = $region82
      $region81: #{neural_net_forward.1} parent=5 // pred_region
        %s281 = ssub.s32 %s15, 1
        %s282 = sand.u32 %s28, 1
        %s283 = sand.u32 %s28, 1
        %s284 = smul.addr %s283, 16
        %s285 = scalar_lea.vmem [#allocation3], %s284
        // Predicated region
        $region83: #{neural_net_forward.1} parent=81 // pred_check
          %p286 = pneg %p41
        $region84: #{neural_net_forward.1} parent=81 // pred_check_branch
          %288 = sbr.rel (%p286) target = $region86
        $region85: #{neural_net_forward.1} parent=81 // pred_region
          _
        $region86: #{neural_net_forward.1} parent=81 // pred_fallthru
          _
        %s289 = sand.u32 %s28, 1
        %s290 = sand.u32 %s28, 1
        %s291 = smul.addr %s290, 16
        %s292 = scalar_lea.vmem [#allocation3], %s291
        %p293 = pneg %p41
        %p294 = pneg %p38
        %p295 = pneg %p62
        %p296 = pneg %p59
        %p297 = pneg %p83
        %p298 = pneg %p80
        %p299 = pneg %p104
        %p300 = pneg %p101
        %p301 = pneg %p125
        %p302 = pneg %p122
        %p303 = pneg %p146
        %p304 = pneg %p143
        %p305 = pneg %p167
        %p306 = pneg %p164
        %p307 = pneg %p193
        %p308 = pneg %p190
        %p309 = scmp.lt.s32.totalorder %s20, 2
        %s310 = scalar_select %p309, %s20, 2
        %s311 = scalar_lea.vmem %s7, %s310
        %p312 = scmp.lt.s32.totalorder %s20, 2
        %s313 = scalar_select %p312, %s20, 2
        %s314 = scalar_lea.vmem %s7, %s313
        %v315 = vld [vmem:[%s285] sm:$0xff]
        %v316 = vld [vmem:[%s285 + $0x8] sm:$0x1]
        %v317 = vld [vmem:[%s1] sm:$0x7f]
        %v318 = vld [vmem:[%s2] sm:$0x7f]
        %320 = vset.pattern.permute.xlu0 0
        %321 = vperm.xlu0 %320, %v317
        %v322 = vpop.permute.xlu0 %321
        %v324 = vlaneseq
        %v325 = vshrl.u32 %v324, 7
        %v326 = vsub.s32 0, %v325
        %v327 = vrot.slane %v315, %v326
        %v328 = vmul.f32 %v322, %v327
        %329 = vset.pattern.permute.xlu0 1
        %330 = vperm.xlu0 %329, %v317
        %v331 = vpop.permute.xlu0 %330
        %v333 = vlaneseq
        %v334 = vshrl.u32 %v333, 7
        %v335 = vsub.s32 1, %v334
        %v336 = vrot.slane %v315, %v335
        %v337 = vmul.f32 %v331, %v336
        %v338 = vadd.f32 %v328, %v337
        %339 = vset.pattern.permute.xlu0 2
        %340 = vperm.xlu0 %339, %v317
        %v341 = vpop.permute.xlu0 %340
        %v343 = vlaneseq
        %v344 = vshrl.u32 %v343, 7
        %v345 = vsub.s32 2, %v344
        %v346 = vrot.slane %v315, %v345
        %v347 = vmul.f32 %v341, %v346
        %v348 = vadd.f32 %v338, %v347
        %349 = vset.pattern.permute.xlu0 3
        %350 = vperm.xlu0 %349, %v317
        %v351 = vpop.permute.xlu0 %350
        %v353 = vlaneseq
        %v354 = vshrl.u32 %v353, 7
        %v355 = vsub.s32 3, %v354
        %v356 = vrot.slane %v315, %v355
        %v357 = vmul.f32 %v351, %v356
        %v358 = vadd.f32 %v348, %v357
        %359 = vset.pattern.permute.xlu0 4
        %360 = vperm.xlu0 %359, %v317
        %v361 = vpop.permute.xlu0 %360
        %v363 = vlaneseq
        %v364 = vshrl.u32 %v363, 7
        %v365 = vsub.s32 4, %v364
        %v366 = vrot.slane %v315, %v365
        %v367 = vmul.f32 %v361, %v366
        %v368 = vadd.f32 %v358, %v367
        %369 = vset.pattern.permute.xlu0 5
        %370 = vperm.xlu0 %369, %v317
        %v371 = vpop.permute.xlu0 %370
        %v373 = vlaneseq
        %v374 = vshrl.u32 %v373, 7
        %v375 = vsub.s32 5, %v374
        %v376 = vrot.slane %v315, %v375
        %v377 = vmul.f32 %v371, %v376
        %v378 = vadd.f32 %v368, %v377
        %379 = vset.pattern.permute.xlu0 6
        %380 = vperm.xlu0 %379, %v317
        %v381 = vpop.permute.xlu0 %380
        %v383 = vlaneseq
        %v384 = vshrl.u32 %v383, 7
        %v385 = vsub.s32 6, %v384
        %v386 = vrot.slane %v315, %v385
        %v387 = vmul.f32 %v381, %v386
        %v388 = vadd.f32 %v378, %v387
        %389 = vset.pattern.permute.xlu0 7
        %390 = vperm.xlu0 %389, %v317
        %v391 = vpop.permute.xlu0 %390
        %v393 = vlaneseq
        %v394 = vshrl.u32 %v393, 7
        %v395 = vsub.s32 7, %v394
        %v396 = vrot.slane %v315, %v395
        %v397 = vmul.f32 %v391, %v396
        %v398 = vadd.f32 %v388, %v397
        %399 = vset.pattern.permute.xlu0 8
        %400 = vperm.xlu0 %399, %v317
        %v401 = vpop.permute.xlu0 %400
        %v403 = vlaneseq
        %v404 = vshrl.u32 %v403, 7
        %v405 = vsub.s32 0, %v404
        %v406 = vrot.slane %v316, %v405
        %v407 = vmul.f32 %v401, %v406
        %v408 = vadd.f32 %v398, %v407
        %410 = vset.pattern.permute.xlu0 0
        %411 = vperm.xlu0 %410, %v318
        %v412 = vpop.permute.xlu0 %411
        %v414 = vadd.f32 %v408, %v412
        %v415 = vsub.f32 0.0, %v414
        %v416 = vmul.f32 %v415, 1.442695
        %v417 = vpow.pop %v416
        %v418 = vadd.f32 %v417, 1.0
        %v419 = vrcp.pop %v418
        %v420 = vld [vmem:[%s3] sm:$0x7f]
        %v421 = vld [vmem:[%s4] sm:$0x7f]
        %423 = vset.pattern.permute.xlu0 0
        %424 = vperm.xlu0 %423, %v420
        %v425 = vpop.permute.xlu0 %424
        %v427 = vlaneseq
        %v428 = vshrl.u32 %v427, 7
        %v429 = vsub.s32 0, %v428
        %v430 = vrot.slane %v419, %v429
        %v431 = vmul.f32 %v425, %v430
        %432 = vset.pattern.permute.xlu0 1
        %433 = vperm.xlu0 %432, %v420
        %v434 = vpop.permute.xlu0 %433
        %v436 = vlaneseq
        %v437 = vshrl.u32 %v436, 7
        %v438 = vsub.s32 1, %v437
        %v439 = vrot.slane %v419, %v438
        %v440 = vmul.f32 %v434, %v439
        %v441 = vadd.f32 %v431, %v440
        %442 = vset.pattern.permute.xlu0 2
        %443 = vperm.xlu0 %442, %v420
        %v444 = vpop.permute.xlu0 %443
        %v446 = vlaneseq
        %v447 = vshrl.u32 %v446, 7
        %v448 = vsub.s32 2, %v447
        %v449 = vrot.slane %v419, %v448
        %v450 = vmul.f32 %v444, %v449
        %v451 = vadd.f32 %v441, %v450
        %452 = vset.pattern.permute.xlu0 3
        %453 = vperm.xlu0 %452, %v420
        %v454 = vpop.permute.xlu0 %453
        %v456 = vlaneseq
        %v457 = vshrl.u32 %v456, 7
        %v458 = vsub.s32 3, %v457
        %v459 = vrot.slane %v419, %v458
        %v460 = vmul.f32 %v454, %v459
        %v461 = vadd.f32 %v451, %v460
        %462 = vset.pattern.permute.xlu0 4
        %463 = vperm.xlu0 %462, %v420
        %v464 = vpop.permute.xlu0 %463
        %v466 = vlaneseq
        %v467 = vshrl.u32 %v466, 7
        %v468 = vsub.s32 4, %v467
        %v469 = vrot.slane %v419, %v468
        %v470 = vmul.f32 %v464, %v469
        %v471 = vadd.f32 %v461, %v470
        %472 = vset.pattern.permute.xlu0 5
        %473 = vperm.xlu0 %472, %v420
        %v474 = vpop.permute.xlu0 %473
        %v476 = vlaneseq
        %v477 = vshrl.u32 %v476, 7
        %v478 = vsub.s32 5, %v477
        %v479 = vrot.slane %v419, %v478
        %v480 = vmul.f32 %v474, %v479
        %v481 = vadd.f32 %v471, %v480
        %482 = vset.pattern.permute.xlu0 6
        %483 = vperm.xlu0 %482, %v420
        %v484 = vpop.permute.xlu0 %483
        %v486 = vlaneseq
        %v487 = vshrl.u32 %v486, 7
        %v488 = vsub.s32 6, %v487
        %v489 = vrot.slane %v419, %v488
        %v490 = vmul.f32 %v484, %v489
        %v491 = vadd.f32 %v481, %v490
        %493 = vset.pattern.permute.xlu0 0
        %494 = vperm.xlu0 %493, %v421
        %v495 = vpop.permute.xlu0 %494
        %v497 = vadd.f32 %v491, %v495
        %v498 = vsub.f32 0.0, %v497
        %v499 = vmul.f32 %v498, 1.442695
        %v500 = vpow.pop %v499
        %v501 = vadd.f32 %v500, 1.0
        %v502 = vrcp.pop %v501
        %v503 = vld [vmem:[%s5] sm:$0x1]
        %v504 = vld [vmem:[#allocation2] sm:$0x1]
        %506 = vset.pattern.permute.xlu0 0
        %507 = vperm.xlu0 %506, %v503
        %v508 = vpop.permute.xlu0 %507
        %v510 = vlaneseq
        %v511 = vshrl.u32 %v510, 7
        %v512 = vsub.s32 0, %v511
        %v513 = vrot.slane %v508, %v512
        %v514 = vmul.f32 %v513, %v502
        %515 = vset.pattern.permute.xlu0 1
        %516 = vperm.xlu0 %515, %v503
        %v517 = vpop.permute.xlu0 %516
        %v519 = vlaneseq
        %v520 = vshrl.u32 %v519, 7
        %v521 = vsub.s32 0, %v520
        %v522 = vrot.slane %v517, %v521
        %v523 = vmul.f32 %v522, %v502
        %v525 = vrot.slane %v523, 1
        %v527 = vadd.f32 %v514, %v525
        %528 = vset.pattern.permute.xlu0 2
        %529 = vperm.xlu0 %528, %v503
        %v530 = vpop.permute.xlu0 %529
        %v532 = vlaneseq
        %v533 = vshrl.u32 %v532, 7
        %v534 = vsub.s32 0, %v533
        %v535 = vrot.slane %v530, %v534
        %v536 = vmul.f32 %v535, %v502
        %v538 = vrot.slane %v536, 2
        %v540 = vadd.f32 %v527, %v538
        %541 = vset.pattern.permute.xlu0 3
        %542 = vperm.xlu0 %541, %v503
        %v543 = vpop.permute.xlu0 %542
        %v545 = vlaneseq
        %v546 = vshrl.u32 %v545, 7
        %v547 = vsub.s32 0, %v546
        %v548 = vrot.slane %v543, %v547
        %v549 = vmul.f32 %v548, %v502
        %v551 = vrot.slane %v549, 3
        %v553 = vadd.f32 %v540, %v551
        %554 = vset.pattern.permute.xlu0 4
        %555 = vperm.xlu0 %554, %v503
        %v556 = vpop.permute.xlu0 %555
        %v558 = vlaneseq
        %v559 = vshrl.u32 %v558, 7
        %v560 = vsub.s32 0, %v559
        %v561 = vrot.slane %v556, %v560
        %v562 = vmul.f32 %v561, %v502
        %v564 = vrot.slane %v562, 4
        %v566 = vadd.f32 %v553, %v564
        %567 = vset.pattern.permute.xlu0 5
        %568 = vperm.xlu0 %567, %v503
        %v569 = vpop.permute.xlu0 %568
        %v571 = vlaneseq
        %v572 = vshrl.u32 %v571, 7
        %v573 = vsub.s32 0, %v572
        %v574 = vrot.slane %v569, %v573
        %v575 = vmul.f32 %v574, %v502
        %v577 = vrot.slane %v575, 5
        %v579 = vadd.f32 %v566, %v577
        %580 = vset.pattern.permute.xlu0 6
        %581 = vperm.xlu0 %580, %v503
        %v582 = vpop.permute.xlu0 %581
        %v584 = vlaneseq
        %v585 = vshrl.u32 %v584, 7
        %v586 = vsub.s32 0, %v585
        %v587 = vrot.slane %v582, %v586
        %v588 = vmul.f32 %v587, %v502
        %v590 = vrot.slane %v588, 6
        %v592 = vadd.f32 %v579, %v590
        %594 = vset.pattern.permute.xlu0 0
        %595 = vperm.xlu0 %594, %v504
        %v596 = vpop.permute.xlu0 %595
        %v598 = vlaneseq
        %v599 = vshrl.u32 %v598, 7
        %v600 = vsub.s32 0, %v599
        %v601 = vrot.slane %v596, %v600
        %v602 = vadd.f32 %v592, %v601
        %603 = vst [vmem:[%s314] sm:$0x1] %v602
        %p604 = scmp.lt.s32.totalorder %s20, 2
        %s605 = scalar_select %p604, %s20, 2
        %s606 = scalar_lea.vmem %s7, %s605
        // Predicated region
        $region87: #{neural_net_forward.1} parent=81 // pred_check
          %p607 = pneg %p190
        $region88: #{neural_net_forward.1} parent=81 // pred_check_branch
          %609 = sbr.rel (%p607) target = $region90
        $region89: #{neural_net_forward.1} parent=81 // pred_region
          _
        $region90: #{neural_net_forward.1} parent=81 // pred_fallthru
          _
      $region82: #{neural_net_forward.1} parent=5 // pred_fallthru
        _
      %p610 = scmp.le.s32.totalorder 2, %s15
      // Predicated region
      $region91: #{neural_net_forward.1} parent=5 // pred_check
        %p611 = pneg %p610
      $region92: #{neural_net_forward.1} parent=5 // pred_check_branch
        %613 = sbr.rel (%p611) target = $region94
      $region93: #{neural_net_forward.1} parent=5 // pred_region
        %s614 = ssub.s32 %s15, 2
        // Predicated region
        $region95: #{neural_net_forward.1} parent=93 // pred_check
          %p615 = pneg %p196
        $region96: #{neural_net_forward.1} parent=93 // pred_check_branch
          %617 = sbr.rel (%p615) target = $region98
        $region97: #{neural_net_forward.1} parent=93 // pred_region
          %p618 = scmp.lt.s32.totalorder %s21, 2
          %s619 = scalar_select %p618, %s21, 2
          %s620 = scalar_lea.vmem %s7, %s619
        $region98: #{neural_net_forward.1} parent=93 // pred_fallthru
          _
      $region94: #{neural_net_forward.1} parent=5 // pred_fallthru
        _
    $region6: #{neural_net_forward.1} parent=1 // loop_footer
      %s19 = sadd.s32 1, %s15
    $region7: #{neural_net_forward.1} parent=1 // loop_footer_branch
      %14 = sbr.rel target = $region3
    $region8: #{neural_net_forward.1} parent=1 // loop_exit
      _

</llo_original>
